<compile_context>
chip_gen: v5e
topology: v5e:2x2
jax: 0.10.0
libtpu: 0.0.40
codegen_flags: <defaults>
</compile_context>

<pallas_src>
import functools

import jax
import jax.numpy as jnp
from jax.experimental import pallas as pl
from jax.experimental.pallas import tpu as pltpu


def _round_up(x, m):
    return ((x + m - 1) // m) * m


def _cdiv(a, b):
    return (a + b - 1) // b


# ----------------------------------------------------------------------------
# Kernel: two MXU passes, EUP sigmoid, VPU blend/ReLU, f32 accumulation.
# ----------------------------------------------------------------------------
def _dpp_model_kernel(x_ref, wf_ref, bf_ref, wout_ref, bout_ref, out_ref, *,
                      out_p):
    # Raw f32 tile -> bf16 on the VPU (no host-side pad/cast copy of x).
    x = x_ref[...].astype(wf_ref.dtype)                       # [TB, IN]

    # One wide MXU pass for z_diff | z_b | g  (gate path pre-folded).
    fused = jnp.dot(x, wf_ref[...],
                    preferred_element_type=jnp.float32) + bf_ref[...]
    z_diff = fused[:, :out_p]                                  # z_a - z_b
    z_b = fused[:, out_p:2 * out_p]
    g = fused[:, 2 * out_p:3 * out_p]                          # gate logits

    alpha = jax.nn.sigmoid(g)                                  # EUP
    h = jnp.maximum(z_b + alpha * z_diff, 0.0)                 # blend + ReLU

    # Final projection (fc_out).
    y = jnp.dot(h.astype(wout_ref.dtype), wout_ref[...],
                preferred_element_type=jnp.float32) + bout_ref[...]
    out_ref[...] = y.astype(out_ref.dtype)


# ----------------------------------------------------------------------------
# One-time parameter preparation: fold -> transpose -> pad lanes -> cast.
# ----------------------------------------------------------------------------
def prepare_params(params, *, compute_dtype=jnp.bfloat16):
    w_a, b_a = params["w_a"], params["b_a"]
    w_b, b_b = params["w_b"], params["b_b"]
    w_gs, b_gs = params["w_g_shared"], params["b_g_shared"]
    w_gu, b_gu = params["w_g_unit"], params["b_g_unit"]
    w_fc, b_fc = params["w_fc_out"], params["b_fc_out"]

    hid, in_dim = w_a.shape
    out_final = w_fc.shape[0]

    out_p = _round_up(hid, 128)
    outf_p = _round_up(out_final, 128)

    # Exact prepare-time algebra (f32):
    #   z_diff = x @ (w_a - w_b).T + (b_a - b_b)
    #   g      = x @ (w_g_unit @ w_g_shared).T + (w_g_unit @ b_g_shared + b_g_unit)
    w_diff = w_a - w_b                                  # [HID, IN]
    b_diff = b_a - b_b
    w_g_comb = w_gu @ w_gs                              # [HID, IN]
    b_g_comb = w_gu @ b_gs + b_gu                       # [HID]

    def pad_t(w, n_p):
        # torch layout [N, K] -> [K, N_p]; K kept exact (no garbage lanes),
        # N zero-padded to a lane-dense multiple of 128.
        n, _k = w.shape
        return jnp.pad(w.T, ((0, 0), (0, n_p - n)))

    def pad_b(b, n_p):
        return jnp.pad(b.reshape(1, -1), ((0, 0), (0, n_p - b.shape[0])))

    w_fused = jnp.concatenate(
        [pad_t(w_diff, out_p), pad_t(w_b, out_p), pad_t(w_g_comb, out_p)],
        axis=1).astype(compute_dtype)                   # [IN, 3*OUT_p]
    b_fused = jnp.concatenate(
        [pad_b(b_diff, out_p), pad_b(b_b, out_p), pad_b(b_g_comb, out_p)],
        axis=1).astype(jnp.float32)                     # [1, 3*OUT_p]

    # fc_out: [OUT, HID] -> [OUT_p, OUTF_p]; padded K rows are zero and the
    # corresponding padded h columns are zero too.
    w_out_t = jnp.pad(
        w_fc.T, ((0, out_p - hid), (0, outf_p - out_final))).astype(compute_dtype)
    b_out = pad_b(b_fc, outf_p).astype(jnp.float32)

    return {
        "dims": (in_dim, hid, out_final, out_p, outf_p),
        "w_fused": w_fused,
        "b_fused": b_fused,
        "w_out_t": w_out_t,
        "b_out": b_out,
    }


def _vmem_capacity_bytes(default_bytes=64 << 20):
    # Real per-core VMEM capacity (64 MiB on v7x, 128 MiB on v5e/v6e);
    # conservative 64 MiB fallback if the query is unavailable.
    try:
        info = pltpu.get_tpu_info()
        cap = getattr(info, "vmem_capacity_bytes", None)
        if cap:
            return int(cap)
    except Exception:
        pass
    return default_bytes


# ----------------------------------------------------------------------------
# Forward wrapper (jitted; weights passed as args so they are not baked in).
# ----------------------------------------------------------------------------
def make_forward(prep, *, tile_b=256):
    (in_dim, _hid, out_final, out_p, outf_p) = prep["dims"]
    vmem_cap = _vmem_capacity_bytes()

    @jax.jit
    def _forward(x, w_fused, b_fused, w_out_t, b_out):
        b = x.shape[0]
        n_fused = w_fused.shape[1]

        # Balanced batch tiles: fewest tiles of <= tile_b rows, balanced sizes;
        # any batch > 16 rows is split into >= 2 tiles (feeds both v7x TCs).
        if b <= 16:
            tb = b if b % 8 == 0 else _round_up(b, 8)
        else:
            n_tiles = max(_cdiv(b, tile_b), 2)
            tb = _round_up(_cdiv(b, n_tiles), 16)
        grid = (_cdiv(b, tb),)

        # Footprint-derived VMEM request, clamped to real chip capacity.
        def nb(a):
            return a.size * a.dtype.itemsize
        weight_bytes = nb(w_fused) + nb(b_fused) + nb(w_out_t) + nb(b_out)
        io_bytes = tb * in_dim * x.dtype.itemsize + tb * outf_p * 2
        temp_bytes = 8 * tb * n_fused * 4
        est = 2 * (weight_bytes + io_bytes) + temp_bytes
        vmem_limit = int(min(max(est + (8 << 20), 32 << 20),
                             vmem_cap - (8 << 20)))

        kernel = functools.partial(_dpp_model_kernel, out_p=out_p)

        y_p = pl.pallas_call(
            kernel,
            out_shape=jax.ShapeDtypeStruct((b, outf_p), jnp.bfloat16),
            grid_spec=pltpu.PrefetchScalarGridSpec(
                num_scalar_prefetch=0,
                grid=grid,
                in_specs=[
                    pl.BlockSpec((tb, in_dim), lambda i: (i, 0)),       # raw f32 x
                    pl.BlockSpec((in_dim, n_fused), lambda i: (0, 0)),  # fused W
                    pl.BlockSpec((1, n_fused), lambda i: (0, 0)),       # fused b
                    pl.BlockSpec((out_p, outf_p), lambda i: (0, 0)),    # w_fc_out.T
                    pl.BlockSpec((1, outf_p), lambda i: (0, 0)),        # b_fc_out
                ],
                out_specs=pl.BlockSpec((tb, outf_p), lambda i: (i, 0)),
            ),
            compiler_params=pltpu.CompilerParams(
                dimension_semantics=("parallel",),
                vmem_limit_bytes=vmem_limit),
        )(x, w_fused, b_fused, w_out_t, b_out)

        # Lane-dense bf16 writeback; slice useful columns and upcast outside.
        return y_p[:, :out_final].astype(jnp.float32)

    def forward(x):
        return _forward(x, prep["w_fused"], prep["b_fused"],
                        prep["w_out_t"], prep["b_out"])

    return forward


# ----------------------------------------------------------------------------
# Deterministic init mirroring PyTorch Linear defaults (kaiming_uniform a=√5).
# ----------------------------------------------------------------------------
def init_params(key, input_features, hidden_dpp, shared_g_dim, output_size):
    ks = jax.random.split(key, 10)

    def kaiming_uniform(k, shape):
        fan_in = shape[1]
        bound = (1.0 / fan_in) ** 0.5   # sqrt(6 / ((1 + 5) * fan_in))
        return jax.random.uniform(k, shape, jnp.float32, -bound, bound)

    def bias_uniform(k, fan_in, n):
        bound = 1.0 / fan_in ** 0.5
        return jax.random.uniform(k, (n,), jnp.float32, -bound, bound)

    return {
        "w_a": kaiming_uniform(ks[0], (hidden_dpp, input_features)),
        "b_a": bias_uniform(ks[1], input_features, hidden_dpp),
        "w_b": kaiming_uniform(ks[2], (hidden_dpp, input_features)),
        "b_b": bias_uniform(ks[3], input_features, hidden_dpp),
        "w_g_shared": kaiming_uniform(ks[4], (shared_g_dim, input_features)),
        "b_g_shared": bias_uniform(ks[5], input_features, shared_g_dim),
        "w_g_unit": kaiming_uniform(ks[6], (hidden_dpp, shared_g_dim)),
        "b_g_unit": bias_uniform(ks[7], shared_g_dim, hidden_dpp),
        "w_fc_out": kaiming_uniform(ks[8], (output_size, hidden_dpp)),
        "b_fc_out": bias_uniform(ks[9], hidden_dpp, output_size),
    }


def dpp_model_reference(x, p):
    z_a = x @ p["w_a"].T + p["b_a"]
    z_b = x @ p["w_b"].T + p["b_b"]
    x_g = x @ p["w_g_shared"].T + p["b_g_shared"]
    g = x_g @ p["w_g_unit"].T + p["b_g_unit"]
    alpha = jax.nn.sigmoid(g)
    h = alpha * z_a + (1.0 - alpha) * z_b
    h = jnp.maximum(h, 0.0)
    return h @ p["w_fc_out"].T + p["b_fc_out"]


if __name__ == "__main__":
    # TODO(synk): return_alpha_flag / self.last_alphas introspection path is not
    # exported from the kernel (alpha is computed but only consumed in-kernel).
    B, IN, HID, G, OUT = 8, 32, 32, 16, 8
    key = jax.random.PRNGKey(0)
    kx, kx2, kp = jax.random.split(key, 3)

    x = jax.random.normal(kx, (B, IN), dtype=jnp.float32)
    params = init_params(kp, IN, HID, G, OUT)

    prep = prepare_params(params)          # one-time fold/transpose/pad/bf16 cast
    forward = make_forward(prep, tile_b=256)

    # Small-batch path (single tile, exact block).
    out = jax.block_until_ready(forward(x))
    ref = dpp_model_reference(x, params)
    assert out.shape == (B, OUT)
    assert jnp.allclose(out, ref, atol=5e-2, rtol=5e-2), (
        f"mismatch vs reference: max err {jnp.max(jnp.abs(out - ref))}")

    # Non-multiple batch exercises the balanced-tile + masked-remainder path
    # (300 rows -> two 160-row tiles, partial last block masked by Pallas).
    B2 = 300
    x2 = jax.random.normal(kx2, (B2, IN), dtype=jnp.float32)
    out2 = jax.block_until_ready(forward(x2))
    ref2 = dpp_model_reference(x2, params)
    assert out2.shape == (B2, OUT)
    assert jnp.allclose(out2, ref2, atol=5e-2, rtol=5e-2), (
        f"mismatch vs reference (tiled): max err {jnp.max(jnp.abs(out2 - ref2))}")

    print("KERNEL_OK")
</pallas_src>

<mosaic_0001>
module attributes {stable_mosaic.version = 11 : i64} {
  func.func @_dpp_model_kernel(%arg0: i32, %arg1: memref<8x32xf32, #tpu.memory_space<vmem>>, %arg2: memref<32x384xbf16, #tpu.memory_space<vmem>>, %arg3: memref<1x384xf32, #tpu.memory_space<vmem>>, %arg4: memref<128x128xbf16, #tpu.memory_space<vmem>>, %arg5: memref<1x128xf32, #tpu.memory_space<vmem>>, %arg6: memref<8x128xbf16, #tpu.memory_space<vmem>>) attributes {dimension_semantics = [#tpu.dimension_semantics<parallel>], iteration_bounds = array<i64: 1>, scalar_prefetch = 0 : i64, scratch_operands = 0 : i64, tpu.core_type = #tpu.core_type<tc>, window_params = [{transform_indices = @transform_0, window_bounds = array<i64: 8, 32>}, {pipeline_mode = #tpu.pipeline_mode<synchronous>, transform_indices = @transform_1, window_bounds = array<i64: 32, 384>}, {pipeline_mode = #tpu.pipeline_mode<synchronous>, transform_indices = @transform_2, window_bounds = array<i64: 1, 384>}, {pipeline_mode = #tpu.pipeline_mode<synchronous>, transform_indices = @transform_3, window_bounds = array<i64: 128, 128>}, {pipeline_mode = #tpu.pipeline_mode<synchronous>, transform_indices = @transform_4, window_bounds = array<i64: 1, 128>}, {transform_indices = @transform_5, window_bounds = array<i64: 8, 128>}]} {
    %c0 = arith.constant 0 : index
    %c0_0 = arith.constant 0 : index
    %0 = vector.load %arg1[%c0, %c0_0] : memref<8x32xf32, #tpu.memory_space<vmem>>, vector<8x32xf32>
    %1 = arith.truncf %0 : vector<8x32xf32> to vector<8x32xbf16>
    %c0_1 = arith.constant 0 : index
    %c0_2 = arith.constant 0 : index
    %2 = vector.load %arg2[%c0_1, %c0_2] : memref<32x384xbf16, #tpu.memory_space<vmem>>, vector<32x384xbf16>
    %cst = arith.constant dense<0.000000e+00> : vector<8x384xf32>
    %3 = tpu.matmul %1, %2, %cst {dimension_numbers = #tpu.dot_dimension_numbers<[1], [0], [0], [1], [0, 0, 1, 1], [], []>} : vector<8x32xbf16>, vector<32x384xbf16>, vector<8x384xf32> -> vector<8x384xf32>
    %c0_3 = arith.constant 0 : index
    %c0_4 = arith.constant 0 : index
    %4 = vector.load %arg3[%c0_3, %c0_4] : memref<1x384xf32, #tpu.memory_space<vmem>>, vector<1x384xf32>
    %5 = vector.broadcast %4 : vector<1x384xf32> to vector<8x384xf32>
    %6 = arith.addf %3, %5 : vector<8x384xf32>
    %7 = vector.extract_strided_slice %6 {offsets = [0, 0], sizes = [8, 128], strides = [1, 1]} : vector<8x384xf32> to vector<8x128xf32>
    %8 = vector.extract_strided_slice %6 {offsets = [0, 128], sizes = [8, 128], strides = [1, 1]} : vector<8x384xf32> to vector<8x128xf32>
    %9 = vector.extract_strided_slice %6 {offsets = [0, 256], sizes = [8, 128], strides = [1, 1]} : vector<8x384xf32> to vector<8x128xf32>
    %10 = arith.negf %9 : vector<8x128xf32>
    %11 = math.exp %10 : vector<8x128xf32>
    %cst_5 = arith.constant 1.000000e+00 : f32
    %12 = vector.broadcast %cst_5 : f32 to vector<8x128xf32>
    %13 = arith.addf %12, %11 : vector<8x128xf32>
    %14 = arith.divf %12, %13 : vector<8x128xf32>
    %15 = arith.mulf %14, %7 : vector<8x128xf32>
    %16 = arith.addf %8, %15 : vector<8x128xf32>
    %cst_6 = arith.constant 0.000000e+00 : f32
    %17 = vector.broadcast %cst_6 : f32 to vector<8x128xf32>
    %18 = arith.maximumf %16, %17 : vector<8x128xf32>
    %19 = arith.truncf %18 : vector<8x128xf32> to vector<8x128xbf16>
    %c0_7 = arith.constant 0 : index
    %c0_8 = arith.constant 0 : index
    %20 = vector.load %arg4[%c0_7, %c0_8] : memref<128x128xbf16, #tpu.memory_space<vmem>>, vector<128x128xbf16>
    %cst_9 = arith.constant dense<0.000000e+00> : vector<8x128xf32>
    %21 = tpu.matmul %19, %20, %cst_9 {dimension_numbers = #tpu.dot_dimension_numbers<[1], [0], [0], [1], [0, 0, 1, 1], [], []>} : vector<8x128xbf16>, vector<128x128xbf16>, vector<8x128xf32> -> vector<8x128xf32>
    %c0_10 = arith.constant 0 : index
    %c0_11 = arith.constant 0 : index
    %22 = vector.load %arg5[%c0_10, %c0_11] : memref<1x128xf32, #tpu.memory_space<vmem>>, vector<1x128xf32>
    %23 = vector.broadcast %22 : vector<1x128xf32> to vector<8x128xf32>
    %24 = arith.addf %21, %23 : vector<8x128xf32>
    %25 = arith.truncf %24 : vector<8x128xf32> to vector<8x128xbf16>
    %c0_12 = arith.constant 0 : index
    %c0_13 = arith.constant 0 : index
    %26 = vector.load %arg6[%c0_12, %c0_13] : memref<8x128xbf16, #tpu.memory_space<vmem>>, vector<8x128xbf16>
    tpu.vector_store %arg6[%c0_12, %c0_13], %25 {strides = array<i32>} : memref<8x128xbf16, #tpu.memory_space<vmem>>, vector<8x128xbf16>,
    return
  }
  func.func @transform_0(%arg0: i32) -> (i32, i32) {
    %c0_i32 = arith.constant 0 : i32
    %c0_i32_0 = arith.constant 0 : i32
    return %arg0, %c0_i32 : i32, i32
  }
  func.func @transform_1(%arg0: i32) -> (i32, i32) {
    %c0_i32 = arith.constant 0 : i32
    %c0_i32_0 = arith.constant 0 : i32
    %c0_i32_1 = arith.constant 0 : i32
    return %c0_i32, %c0_i32_0 : i32, i32
  }
  func.func @transform_2(%arg0: i32) -> (i32, i32) {
    %c0_i32 = arith.constant 0 : i32
    %c0_i32_0 = arith.constant 0 : i32
    %c0_i32_1 = arith.constant 0 : i32
    return %c0_i32, %c0_i32_0 : i32, i32
  }
  func.func @transform_3(%arg0: i32) -> (i32, i32) {
    %c0_i32 = arith.constant 0 : i32
    %c0_i32_0 = arith.constant 0 : i32
    %c0_i32_1 = arith.constant 0 : i32
    return %c0_i32, %c0_i32_0 : i32, i32
  }
  func.func @transform_4(%arg0: i32) -> (i32, i32) {
    %c0_i32 = arith.constant 0 : i32
    %c0_i32_0 = arith.constant 0 : i32
    %c0_i32_1 = arith.constant 0 : i32
    return %c0_i32, %c0_i32_0 : i32, i32
  }
  func.func @transform_5(%arg0: i32) -> (i32, i32) {
    %c0_i32 = arith.constant 0 : i32
    %c0_i32_0 = arith.constant 0 : i32
    return %arg0, %c0_i32 : i32, i32
  }
}

</mosaic_0001>

<llo_original>
// kernel: _forward.1
$region0: #{_forward.1}
  #allocation0 [shape = 'u32[]', space=smem, size = 0x4, offset = 0x4, fixed_abs, tag = 'smem constant byte address 0x4 - core index']
  #allocation1 [shape = 'u32[72,128]{1,0:T(1,128)}', space=vmem, size = 0x9000, scoped, tag = 'internal scratch']
  %s0 = inlined_call_operand.hbm [shape: f32[8,32], index: 0, kind: input, shape index: {}]
  %s1 = inlined_call_operand.hbm [shape: bf16[32,384], index: 1, kind: input, shape index: {}]
  %s2 = inlined_call_operand.hbm [shape: f32[1,384], index: 2, kind: input, shape index: {}]
  %s3 = inlined_call_operand.hbm [shape: bf16[128,128], index: 3, kind: input, shape index: {}]
  %s4 = inlined_call_operand.vmem [shape: f32[1,128], index: 4, kind: input, shape index: {}]
  %s5 = inlined_call_operand.vmem [shape: bf16[8,128], index: 5, kind: output, shape index: {}]
  %s6 = sld [smem:[#allocation0]]
  $region46: #{_forward.1} parent=0
    _
  %s8 = ssub.s32 1, %s6
  %s9 = scalar_select 0, %s8, %s6
  $region1: #{_forward.1} parent=0
    #allocation2 [shape = 'u8[4096]{0}', space=vmem, size = 0x1000, scoped, tag = 'input window, operand 0, single buffered']
    #allocation3 [shape = 's32[1]{0}', space=sflag, size = 0x4, scoped, tag = 'scoped memory for _forward.1']
    #allocation4 [shape = 'u8[24576]{0}', space=vmem, size = 0x6000, scoped, tag = 'input window, operand 1, single buffered']
    #allocation5 [shape = 's32[1]{0}', space=sflag, size = 0x4, scoped, tag = 'scoped memory for _forward.1']
    #allocation6 [shape = 'u8[1536]{0}', space=vmem, size = 0x800, scoped, tag = 'input window, operand 2, single buffered']
    #allocation7 [shape = 'u8[32768]{0}', space=vmem, size = 0x8000, scoped, tag = 'input window, operand 3, single buffered']
    #allocation8 [shape = 's32[1]{0}', space=sflag, size = 0x4, scoped, tag = 'scoped memory for _forward.1']
    %10 = vsyncpa [#allocation3], 0
    %11 = vsyncpa [#allocation5], 0
    %12 = vsyncpa [#allocation8], 0
    // Predicated region
    $region2: #{_forward.1} parent=1 // pred_check
      _
    $region3: #{_forward.1} parent=1 // pred_check_branch
      %14 = sbr.rel (0) target = $region5
    $region4: #{_forward.1} parent=1 // pred_region
      %16 = vsyncadd [#allocation3], 0
      %s18 = sshll.u32 %s0, 4
      %s19 = int_to_ptr.hbm [resolvable:$true] %s18
      %s20 = sshll.u32 [#allocation2], 4
      %s21 = int_to_ptr.vmem [resolvable:$true] %s20
      %23 = dma.hbm_to_vmem [thread:$0]  %s19, 128, %s21, [#allocation3]
    $region5: #{_forward.1} parent=1 // pred_fallthru
      _
    // Predicated region
    $region6: #{_forward.1} parent=1 // pred_check
      _
    $region7: #{_forward.1} parent=1 // pred_check_branch
      %25 = sbr.rel (0) target = $region9
    $region8: #{_forward.1} parent=1 // pred_region
      %27 = vsyncadd [#allocation5], 0
      %s28 = sshll.u32 %s1, 4
      %s29 = int_to_ptr.hbm [resolvable:$true] %s28
      %s30 = sshll.u32 [#allocation4], 4
      %s31 = int_to_ptr.vmem [resolvable:$true] %s30
      %36 = dma.hbm_to_vmem [thread:$0]  %s29, 768, %s31, [#allocation5], 192, 192, 12
    $region9: #{_forward.1} parent=1 // pred_fallthru
      _
    // Predicated region
    $region10: #{_forward.1} parent=1 // pred_check
      _
    $region11: #{_forward.1} parent=1 // pred_check_branch
      %38 = sbr.rel (0) target = $region13
    $region12: #{_forward.1} parent=1 // pred_region
      %40 = vsyncadd [#allocation5], 0
      %s42 = sshll.u32 %s2, 4
      %s43 = int_to_ptr.hbm [resolvable:$true] %s42
      %s44 = sshll.u32 [#allocation6], 4
      %s45 = int_to_ptr.vmem [resolvable:$true] %s44
      %47 = dma.hbm_to_vmem [thread:$0]  %s43, 48, %s45, [#allocation5]
    $region13: #{_forward.1} parent=1 // pred_fallthru
      _
    // Predicated region
    $region14: #{_forward.1} parent=1 // pred_check
      _
    $region15: #{_forward.1} parent=1 // pred_check_branch
      %49 = sbr.rel (0) target = $region17
    $region16: #{_forward.1} parent=1 // pred_region
      %51 = vsyncadd [#allocation8], 0
      %s52 = sshll.u32 %s3, 4
      %s53 = int_to_ptr.hbm [resolvable:$true] %s52
      %s54 = sshll.u32 [#allocation7], 4
      %s55 = int_to_ptr.vmem [resolvable:$true] %s54
      %60 = dma.hbm_to_vmem [thread:$0]  %s53, 1024, %s55, [#allocation8], 64, 64, 4
    $region17: #{_forward.1} parent=1 // pred_fallthru
      _
    // Predicated region
    $region18: #{_forward.1} parent=1 // pred_check
      _
    $region19: #{_forward.1} parent=1 // pred_check_branch
      %62 = sbr.rel (0) target = $region21
    $region20: #{_forward.1} parent=1 // pred_region
      _
    $region21: #{_forward.1} parent=1 // pred_fallthru
      _
    // Predicated region
    $region22: #{_forward.1} parent=1 // pred_check
      _
    $region23: #{_forward.1} parent=1 // pred_check_branch
      %64 = sbr.rel (0) target = $region25
    $region24: #{_forward.1} parent=1 // pred_region
      %66 = dma.done [#allocation3], 128
    $region25: #{_forward.1} parent=1 // pred_fallthru
      _
    // Predicated region
    $region26: #{_forward.1} parent=1 // pred_check
      _
    $region27: #{_forward.1} parent=1 // pred_check_branch
      %68 = sbr.rel (0) target = $region29
    $region28: #{_forward.1} parent=1 // pred_region
      %70 = dma.done [#allocation5], 768
    $region29: #{_forward.1} parent=1 // pred_fallthru
      _
    // Predicated region
    $region30: #{_forward.1} parent=1 // pred_check
      _
    $region31: #{_forward.1} parent=1 // pred_check_branch
      %72 = sbr.rel (0) target = $region33
    $region32: #{_forward.1} parent=1 // pred_region
      %74 = dma.done [#allocation5], 48
    $region33: #{_forward.1} parent=1 // pred_fallthru
      _
    // Predicated region
    $region34: #{_forward.1} parent=1 // pred_check
      _
    $region35: #{_forward.1} parent=1 // pred_check_branch
      %76 = sbr.rel (0) target = $region37
    $region36: #{_forward.1} parent=1 // pred_region
      %78 = dma.done [#allocation8], 1024
    $region37: #{_forward.1} parent=1 // pred_fallthru
      _
    %v80 = vld [vmem:[#allocation2] sm:$0xff]
    %v81 = vpack.c.bf16 %v80, %v80
    %v82 = vld [vmem:[#allocation4] sm:$0xff]
    %v83 = vld [vmem:[#allocation4 + $0x8] sm:$0xf]
    %v84 = vld [vmem:[#allocation4 + $0xc] sm:$0xff]
    %v85 = vld [vmem:[#allocation4 + $0x14] sm:$0xf]
    %v86 = vld [vmem:[#allocation4 + $0x18] sm:$0xff]
    %v87 = vld [vmem:[#allocation4 + $0x20] sm:$0xf]
    %v88 = vld [vmem:[#allocation4 + $0x24] sm:$0xff]
    %v89 = vld [vmem:[#allocation4 + $0x2c] sm:$0xf]
    %v90 = vld [vmem:[#allocation6] sm:$0x7]
    %v92 = vperm.slane %v90, 0
    %v93 = vperm.slane %v90, 1
    %v94 = vperm.slane %v90, 2
    %v106 = vunpack.c.l.b16 %v82
    %v107 = vunpack.c.h.b16 %v82
    %v108 = vunpack.c.l.b16 %v83
    %v109 = vunpack.c.l.b16 %v84
    %v110 = vunpack.c.h.b16 %v84
    %v111 = vunpack.c.l.b16 %v85
    %v112 = vunpack.c.l.b16 %v86
    %v113 = vunpack.c.h.b16 %v86
    %v114 = vunpack.c.l.b16 %v87
    %v115 = vunpack.c.l.b16 %v88
    %v116 = vunpack.c.h.b16 %v88
    %v117 = vunpack.c.l.b16 %v89
    %v118 = vpack.c.b16 %v109, %v106
    %v119 = vpack.c.b16 %v110, %v107
    %v120 = vpack.c.b16 %v111, %v108
    %v121 = vpack.c.b16 %v115, %v112
    %v122 = vpack.c.b16 %v116, %v113
    %v123 = vpack.c.b16 %v117, %v114
    %vm130 = vcmask 261120
    %v132 = vsel %vm130, %v81, 0
    %134 = vmatpush.bf16.msra.mxu0 0
    %135 = vmatpush.bf16.msra.mxu0 0
    %136 = vmatpush.bf16.msra.mxu0 0
    %137 = vmatpush.bf16.msra.mxu0 0
    %138 = vmatpush.bf16.msra.mxu0 0
    %139 = vmatpush.bf16.msra.mxu0 0
    %140 = vmatpush.bf16.msra.mxu0 %v121
    %141 = vmatpush.bf16.msra.mxu0 %v118
    %142 = vmatmul.bf16.gmra.mxu0 %v132
    %v143 = vpop.f32.mrf.mxu0
    %v144 = vadd.f32 %v92, %v143
    %v145 = vpop.f32.mrf.mxu0
    %146 = vdwg.mxu0
    %147 = vmatpush.bf16.msra.mxu0 0
    %148 = vmatpush.bf16.msra.mxu0 0
    %149 = vmatpush.bf16.msra.mxu0 0
    %150 = vmatpush.bf16.msra.mxu0 0
    %151 = vmatpush.bf16.msra.mxu0 0
    %152 = vmatpush.bf16.msra.mxu0 0
    %153 = vmatpush.bf16.msra.mxu0 %v122
    %154 = vmatpush.bf16.msra.mxu0 %v119
    %155 = vmatmul.bf16.gmra.mxu0 %v132
    %v156 = vpop.f32.mrf.mxu0
    %v157 = vadd.f32 %v93, %v156
    %v158 = vpop.f32.mrf.mxu0
    %159 = vdwg.mxu0
    %160 = vmatpush.bf16.msra.mxu0 0
    %161 = vmatpush.bf16.msra.mxu0 0
    %162 = vmatpush.bf16.msra.mxu0 0
    %163 = vmatpush.bf16.msra.mxu0 0
    %164 = vmatpush.bf16.msra.mxu0 0
    %165 = vmatpush.bf16.msra.mxu0 0
    %166 = vmatpush.bf16.msra.mxu0 %v123
    %167 = vmatpush.bf16.msra.mxu0 %v120
    %168 = vmatmul.bf16.gmra.mxu0 %v132
    %v169 = vpop.f32.mrf.mxu0
    %v170 = vadd.f32 %v94, %v169
    %v171 = vpop.f32.mrf.mxu0
    %172 = vdwg.mxu0
    %v173 = vxor.u32 %v170, 2147483648
    %v174 = vmul.f32 %v173, 1.442695
    %v175 = vpow.pop %v174
    %v176 = vadd.f32 %v175, 1.0
    %v177 = vrcp.pop %v176
    %v178 = vmul.f32 %v176, %v177
    %v179 = vsub.f32 1.0, %v178
    %v180 = vmul.f32 %v177, %v179
    %v181 = vadd.f32 %v177, %v180
    %vm182 = vweird.f32 %v176
    %vm183 = vweird.f32 %v177
    %vm184 = vmor %vm182, %vm183
    %v185 = vsel %vm184, %v177, %v181
    %v186 = vand.u32 2147483647, %v176
    %vm187 = vcmp.eq.f32.partialorder %v186, 8.507059e+37
    %v188 = vand.u32 %v176, 2147483648
    %v189 = vor.u32 1.1754944e-38, %v188
    %v190 = vsel %vm187, %v189, %v185
    %v191 = vmul.f32 1.0, %v190
    %v192 = vmul.f32 %v191, %v144
    %v193 = vadd.f32 %v157, %v192
    %v194 = vmax.f32 %v193, 0.0
    %v195 = vpack.c.bf16 %v194, %v194
    %v196 = vld [vmem:[#allocation7] sm:$0xf]
    %v197 = vld [vmem:[#allocation7 + $0x4] sm:$0xf]
    %v198 = vld [vmem:[#allocation7 + $0x8] sm:$0xf]
    %v199 = vld [vmem:[#allocation7 + $0xc] sm:$0xf]
    %v200 = vld [vmem:[#allocation7 + $0x10] sm:$0xf]
    %v201 = vld [vmem:[#allocation7 + $0x14] sm:$0xf]
    %v202 = vld [vmem:[#allocation7 + $0x18] sm:$0xf]
    %v203 = vld [vmem:[#allocation7 + $0x1c] sm:$0xf]
    %v204 = vld [vmem:[#allocation7 + $0x20] sm:$0xf]
    %v205 = vld [vmem:[#allocation7 + $0x24] sm:$0xf]
    %v206 = vld [vmem:[#allocation7 + $0x28] sm:$0xf]
    %v207 = vld [vmem:[#allocation7 + $0x2c] sm:$0xf]
    %v208 = vld [vmem:[#allocation7 + $0x30] sm:$0xf]
    %v209 = vld [vmem:[#allocation7 + $0x34] sm:$0xf]
    %v210 = vld [vmem:[#allocation7 + $0x38] sm:$0xf]
    %v211 = vld [vmem:[#allocation7 + $0x3c] sm:$0xf]
    %v212 = vld [vmem:[%s4] sm:$0x1]
    %v214 = vperm.slane %v212, 0
    %v232 = vunpack.c.l.b16 %v196
    %v233 = vunpack.c.l.b16 %v197
    %v234 = vunpack.c.l.b16 %v198
    %v235 = vunpack.c.l.b16 %v199
    %v236 = vunpack.c.l.b16 %v200
    %v237 = vunpack.c.l.b16 %v201
    %v238 = vunpack.c.l.b16 %v202
    %v239 = vunpack.c.l.b16 %v203
    %v240 = vunpack.c.l.b16 %v204
    %v241 = vunpack.c.l.b16 %v205
    %v242 = vunpack.c.l.b16 %v206
    %v243 = vunpack.c.l.b16 %v207
    %v244 = vunpack.c.l.b16 %v208
    %v245 = vunpack.c.l.b16 %v209
    %v246 = vunpack.c.l.b16 %v210
    %v247 = vunpack.c.l.b16 %v211
    %v248 = vpack.c.b16 %v233, %v232
    %v249 = vpack.c.b16 %v235, %v234
    %v250 = vpack.c.b16 %v237, %v236
    %v251 = vpack.c.b16 %v239, %v238
    %v252 = vpack.c.b16 %v241, %v240
    %v253 = vpack.c.b16 %v243, %v242
    %v254 = vpack.c.b16 %v245, %v244
    %v255 = vpack.c.b16 %v247, %v246
    %264 = vmatpush.bf16.msra.mxu0 %v255
    %265 = vmatpush.bf16.msra.mxu0 %v254
    %266 = vmatpush.bf16.msra.mxu0 %v253
    %267 = vmatpush.bf16.msra.mxu0 %v252
    %268 = vmatpush.bf16.msra.mxu0 %v251
    %269 = vmatpush.bf16.msra.mxu0 %v250
    %270 = vmatpush.bf16.msra.mxu0 %v249
    %271 = vmatpush.bf16.msra.mxu0 %v248
    %272 = vmatmul.bf16.gmra.mxu0 %v195
    %v273 = vpop.f32.mrf.mxu0
    %v274 = vadd.f32 %v214, %v273
    %v275 = vpop.f32.mrf.mxu0
    %276 = vdwg.mxu0
    %v277 = vpack.c.bf16 %v274, %v274
    %278 = vst [vmem:[%s5] sm:$0xf] %v277
    // Predicated region
    $region38: #{_forward.1} parent=1 // pred_check
      _
    $region39: #{_forward.1} parent=1 // pred_check_branch
      %280 = sbr.rel (0) target = $region41
    $region40: #{_forward.1} parent=1 // pred_region
      _
    $region41: #{_forward.1} parent=1 // pred_fallthru
      _
    // Predicated region
    $region42: #{_forward.1} parent=1 // pred_check
      _
    $region43: #{_forward.1} parent=1 // pred_check_branch
      %282 = sbr.rel (0) target = $region45
    $region44: #{_forward.1} parent=1 // pred_region
      _
    $region45: #{_forward.1} parent=1 // pred_fallthru
      _
    %283 = vsyncpa [#allocation3], 1
    %284 = vsyncpa [#allocation5], 1
    %285 = vsyncpa [#allocation8], 1

</llo_original>
